<compile_context>
chip_gen: v6e
topology: v6e:2x2x1
jax: 0.10.0
libtpu: 0.0.40
codegen_flags: <defaults>
</compile_context>

<pallas_src>
import functools

import jax
import jax.numpy as jnp
from jax.experimental import pallas as pl
from jax.experimental.pallas import tpu as pltpu


def _round_up(x: int, m: int) -> int:
    return ((x + m - 1) // m) * m


def _linear_kernel_acc(x_ref, w_ref, o_ref, acc_ref):
    """One (tm, tn) output tile, accumulated over the K grid axis.

    x_ref:   (tm, tk) activation tile
    w_ref:   (tn, tk) weight tile in PyTorch (out, in) layout
    o_ref:   (tm, tn) output tile
    acc_ref: (tm, tn) f32 VMEM accumulator (persists across the K axis)
    """
    @pl.when(pl.program_id(2) == 0)
    def _init():
        acc_ref[...] = jnp.zeros_like(acc_ref)

    # Contract x dim 1 against w dim 1  ==  x @ W^T, no transpose pass needed.
    acc_ref[...] += jax.lax.dot_general(
        x_ref[...],
        w_ref[...],
        dimension_numbers=(((1,), (1,)), ((), ())),
        preferred_element_type=jnp.float32,
    )

    @pl.when(pl.program_id(2) == pl.num_programs(2) - 1)
    def _store():
        o_ref[...] = acc_ref[...].astype(o_ref.dtype)


def _linear_kernel_single_k(x_ref, w_ref, o_ref):
    """Fast path: full K fits in one tile -> no accumulator, direct store."""
    o_ref[...] = jax.lax.dot_general(
        x_ref[...],
        w_ref[...],
        dimension_numbers=(((1,), (1,)), ((), ())),
        preferred_element_type=jnp.float32,
    ).astype(o_ref.dtype)


@functools.partial(jax.jit, static_argnames=("tm", "tn", "tk"))
def linear_pallas(x, weight, *, tm: int = 128, tn: int = 128, tk: int = 512):
    """x: (B, inp); weight: (out, inp) in PyTorch nn.Linear convention."""
    M, K = x.shape
    N, Kw = weight.shape
    assert K == Kw, (K, Kw)

    # Clamp tiles to the (alignment-rounded) problem size, keeping (8, 128)
    # layout alignment and lane-dense (128-multiple) output stores.
    tm = min(tm, _round_up(M, 8))
    tn = min(tn, _round_up(N, 128))
    tk = min(tk, _round_up(K, 128))

    Mp, Np, Kp = _round_up(M, tm), _round_up(N, tn), _round_up(K, tk)
    if (Mp, Kp) != (M, K):
        x = jnp.pad(x, ((0, Mp - M), (0, Kp - K)))
    if (Np, Kp) != (N, K):
        weight = jnp.pad(weight, ((0, Np - N), (0, Kp - K)))

    cost = pl.CostEstimate(
        flops=2 * M * N * K,
        transcendentals=0,
        bytes_accessed=x.dtype.itemsize * (M * K + N * K + M * N),
    )

    if Kp == tk:
        # Single K step: 2-D grid, no accumulator scratch, no pl.when.
        grid = (Mp // tm, Np // tn)
        y = pl.pallas_call(
            _linear_kernel_single_k,
            out_shape=jax.ShapeDtypeStruct((Mp, Np), x.dtype),
            grid_spec=pltpu.PrefetchScalarGridSpec(
                num_scalar_prefetch=0,
                grid=grid,
                in_specs=[
                    pl.BlockSpec((tm, Kp), lambda i, j: (i, 0)),  # x tile
                    pl.BlockSpec((tn, Kp), lambda i, j: (j, 0)),  # W tile (out, in)
                ],
                out_specs=pl.BlockSpec((tm, tn), lambda i, j: (i, j)),
            ),
            compiler_params=pltpu.CompilerParams(
                dimension_semantics=("parallel", "parallel"),
            ),
            cost_estimate=cost,
        )(x, weight)
    else:
        grid = (Mp // tm, Np // tn, Kp // tk)
        y = pl.pallas_call(
            _linear_kernel_acc,
            out_shape=jax.ShapeDtypeStruct((Mp, Np), x.dtype),
            grid_spec=pltpu.PrefetchScalarGridSpec(
                num_scalar_prefetch=0,
                grid=grid,
                in_specs=[
                    pl.BlockSpec((tm, tk), lambda i, j, k: (i, k)),  # x tile
                    pl.BlockSpec((tn, tk), lambda i, j, k: (j, k)),  # W tile
                ],
                out_specs=pl.BlockSpec((tm, tn), lambda i, j, k: (i, j)),
                scratch_shapes=[pltpu.VMEM((tm, tn), jnp.float32)],
            ),
            compiler_params=pltpu.CompilerParams(
                dimension_semantics=("parallel", "parallel", "arbitrary"),
            ),
            cost_estimate=cost,
        )(x, weight)

    if (Mp, Np) != (M, N):
        y = y[:M, :N]
    return y


if __name__ == "__main__":
    key = jax.random.PRNGKey(0)
    k_x, k_w = jax.random.split(key)

    batch, inp, out = 8, 32, 16

    x = jax.random.normal(k_x, (batch, inp), dtype=jnp.float32)
    # Deterministic init mimicking nn.Linear default: U(-1/sqrt(inp), 1/sqrt(inp))
    bound = 1.0 / jnp.sqrt(jnp.float32(inp))
    weight = jax.random.uniform(
        k_w, (out, inp), dtype=jnp.float32, minval=-bound, maxval=bound
    )

    y = linear_pallas(x, weight)
    jax.block_until_ready(y)

    # Correctness check vs plain JAX reference (nn.Linear forward, bias=False)
    y_ref = x @ weight.T
    assert y.shape == (batch, out)
    assert jnp.allclose(y, y_ref, atol=1e-5, rtol=1e-5)

    # Also exercise the multi-K-step accumulator path at a larger shape.
    M2, K2, N2 = 256, 1024, 384
    x2 = jax.random.normal(k_x, (M2, K2), dtype=jnp.float32)
    w2 = jax.random.normal(k_w, (N2, K2), dtype=jnp.float32) * 0.02
    y2 = linear_pallas(x2, w2)
    jax.block_until_ready(y2)
    assert jnp.allclose(y2, x2 @ w2.T, atol=1e-3, rtol=1e-3)

    print("KERNEL_OK")
</pallas_src>

<mosaic_0001>
module attributes {stable_mosaic.version = 11 : i64} {
  func.func @_linear_kernel_single_k(%arg0: i32, %arg1: i32, %arg2: memref<8x128xf32, #tpu.memory_space<vmem>>, %arg3: memref<128x128xf32, #tpu.memory_space<vmem>>, %arg4: memref<8x128xf32, #tpu.memory_space<vmem>>) attributes {dimension_semantics = [#tpu.dimension_semantics<parallel>, #tpu.dimension_semantics<parallel>], iteration_bounds = array<i64: 1, 1>, scalar_prefetch = 0 : i64, scratch_operands = 0 : i64, tpu.core_type = #tpu.core_type<tc>, window_params = [{transform_indices = @transform_0, window_bounds = array<i64: 8, 128>}, {transform_indices = @transform_1, window_bounds = array<i64: 128, 128>}, {transform_indices = @transform_2, window_bounds = array<i64: 8, 128>}]} {
    %c0 = arith.constant 0 : index
    %c0_0 = arith.constant 0 : index
    %0 = vector.load %arg2[%c0, %c0_0] : memref<8x128xf32, #tpu.memory_space<vmem>>, vector<8x128xf32>
    %c0_1 = arith.constant 0 : index
    %c0_2 = arith.constant 0 : index
    %1 = vector.load %arg3[%c0_1, %c0_2] : memref<128x128xf32, #tpu.memory_space<vmem>>, vector<128x128xf32>
    %cst = arith.constant dense<0.000000e+00> : vector<8x128xf32>
    %2 = tpu.matmul %0, %1, %cst {dimension_numbers = #tpu.dot_dimension_numbers<[1], [1], [0], [0], [0, 0, 1, 0], [], []>} : vector<8x128xf32>, vector<128x128xf32>, vector<8x128xf32> -> vector<8x128xf32>
    %c0_3 = arith.constant 0 : index
    %c0_4 = arith.constant 0 : index
    %3 = vector.load %arg4[%c0_3, %c0_4] : memref<8x128xf32, #tpu.memory_space<vmem>>, vector<8x128xf32>
    tpu.vector_store %arg4[%c0_3, %c0_4], %2 {strides = array<i32>} : memref<8x128xf32, #tpu.memory_space<vmem>>, vector<8x128xf32>,
    return
  }
  func.func @transform_0(%arg0: i32, %arg1: i32) -> (i32, i32) {
    %c0_i32 = arith.constant 0 : i32
    %c0_i32_0 = arith.constant 0 : i32
    return %arg0, %c0_i32 : i32, i32
  }
  func.func @transform_1(%arg0: i32, %arg1: i32) -> (i32, i32) {
    %c0_i32 = arith.constant 0 : i32
    %c0_i32_0 = arith.constant 0 : i32
    return %arg1, %c0_i32 : i32, i32
  }
  func.func @transform_2(%arg0: i32, %arg1: i32) -> (i32, i32) {
    %c0_i32 = arith.constant 0 : i32
    return %arg0, %arg1 : i32, i32
  }
}

</mosaic_0001>

<llo_original>
// kernel: linear_pallas.1
$region0: #{linear_pallas.1}
  #allocation0 [shape = 'u32[]', space=smem, size = 0x4, offset = 0x4, fixed_abs, tag = 'smem constant byte address 0x4 - core index']
  #allocation1 [shape = 'u32[144,128]{1,0:T(1,128)}', space=vmem, size = 0x12000, scoped, tag = 'internal scratch']
  %s0 = inlined_call_operand.vmem [shape: f32[8,128], index: 0, kind: input, shape index: {}]
  %s1 = inlined_call_operand.vmem [shape: f32[128,128], index: 1, kind: input, shape index: {}]
  %s2 = inlined_call_operand.hbm [shape: f32[8,128], index: 2, kind: output, shape index: {}]
  %s3 = sld [smem:[#allocation0]]
  $region18: #{linear_pallas.1} parent=0
    _
  %s5 = ssub.s32 1, %s3
  %s6 = scalar_select 0, %s5, %s3
  $region1: #{linear_pallas.1} parent=0
    #allocation2 [shape = 'u8[4096]{0}', space=vmem, size = 0x1000, scoped, tag = 'output window, operand 0, single buffered']
    #allocation3 [shape = 's32[1]{0}', space=sflag, size = 0x4, scoped, tag = 'scoped memory for linear_pallas.1']
    %7 = vsyncpa [#allocation3], 0
    // Predicated region
    $region2: #{linear_pallas.1} parent=1 // pred_check
      _
    $region3: #{linear_pallas.1} parent=1 // pred_check_branch
      %9 = sbr.rel (0) target = $region5
    $region4: #{linear_pallas.1} parent=1 // pred_region
      _
    $region5: #{linear_pallas.1} parent=1 // pred_fallthru
      _
    // Predicated region
    $region6: #{linear_pallas.1} parent=1 // pred_check
      _
    $region7: #{linear_pallas.1} parent=1 // pred_check_branch
      %11 = sbr.rel (0) target = $region9
    $region8: #{linear_pallas.1} parent=1 // pred_region
      _
    $region9: #{linear_pallas.1} parent=1 // pred_fallthru
      _
    %v12 = vld [vmem:[%s0] sm:$0xff]
    %v13 = vld [vmem:[%s1] sm:$0xff]
    %v14 = vld [vmem:[%s1 + $0x8] sm:$0xff]
    %v15 = vld [vmem:[%s1 + $0x10] sm:$0xff]
    %v16 = vld [vmem:[%s1 + $0x18] sm:$0xff]
    %v17 = vld [vmem:[%s1 + $0x20] sm:$0xff]
    %v18 = vld [vmem:[%s1 + $0x28] sm:$0xff]
    %v19 = vld [vmem:[%s1 + $0x30] sm:$0xff]
    %v20 = vld [vmem:[%s1 + $0x38] sm:$0xff]
    %v21 = vld [vmem:[%s1 + $0x40] sm:$0xff]
    %v22 = vld [vmem:[%s1 + $0x48] sm:$0xff]
    %v23 = vld [vmem:[%s1 + $0x50] sm:$0xff]
    %v24 = vld [vmem:[%s1 + $0x58] sm:$0xff]
    %v25 = vld [vmem:[%s1 + $0x60] sm:$0xff]
    %v26 = vld [vmem:[%s1 + $0x68] sm:$0xff]
    %v27 = vld [vmem:[%s1 + $0x70] sm:$0xff]
    %v28 = vld [vmem:[%s1 + $0x78] sm:$0xff]
    %29 = vmatprep.subr.mxu0 0.0
    %30 = vmatpush1.xpose.msra.mxu0 %v28
    %31 = vmatprep.subr.mxu0 0.0
    %32 = vmatpush1.xpose.msra.mxu0 %v27
    %33 = vmatprep.subr.mxu0 0.0
    %34 = vmatpush1.xpose.msra.mxu0 %v26
    %35 = vmatprep.subr.mxu0 0.0
    %36 = vmatpush1.xpose.msra.mxu0 %v25
    %37 = vmatprep.subr.mxu0 0.0
    %38 = vmatpush1.xpose.msra.mxu0 %v24
    %39 = vmatprep.subr.mxu0 0.0
    %40 = vmatpush1.xpose.msra.mxu0 %v23
    %41 = vmatprep.subr.mxu0 0.0
    %42 = vmatpush1.xpose.msra.mxu0 %v22
    %43 = vmatprep.subr.mxu0 0.0
    %44 = vmatpush1.xpose.msra.mxu0 %v21
    %45 = vmatprep.subr.mxu0 0.0
    %46 = vmatpush1.xpose.msra.mxu0 %v20
    %47 = vmatprep.subr.mxu0 0.0
    %48 = vmatpush1.xpose.msra.mxu0 %v19
    %49 = vmatprep.subr.mxu0 0.0
    %50 = vmatpush1.xpose.msra.mxu0 %v18
    %51 = vmatprep.subr.mxu0 0.0
    %52 = vmatpush1.xpose.msra.mxu0 %v17
    %53 = vmatprep.subr.mxu0 0.0
    %54 = vmatpush1.xpose.msra.mxu0 %v16
    %55 = vmatprep.subr.mxu0 0.0
    %56 = vmatpush1.xpose.msra.mxu0 %v15
    %57 = vmatprep.subr.mxu0 0.0
    %58 = vmatpush1.xpose.msra.mxu0 %v14
    %59 = vmatprep.subr.mxu0 0.0
    %60 = vmatpush1.xpose.msra.mxu0 %v13
    %61 = vmatprep.subr.mxu0 0.0
    %62 = vmatpush2.xpose.msra.mxu0 0.0
    %63 = vmatprep.subr.mxu0 0.0
    %64 = vmatpush2.xpose.msra.mxu0 0.0
    %65 = vmatprep.subr.mxu0 0.0
    %66 = vmatpush2.xpose.msra.mxu0 0.0
    %67 = vmatprep.subr.mxu0 0.0
    %68 = vmatpush2.xpose.msra.mxu0 0.0
    %69 = vmatprep.subr.mxu0 0.0
    %70 = vmatpush2.xpose.msra.mxu0 0.0
    %71 = vmatprep.subr.mxu0 0.0
    %72 = vmatpush2.xpose.msra.mxu0 0.0
    %73 = vmatprep.subr.mxu0 0.0
    %74 = vmatpush2.xpose.msra.mxu0 0.0
    %75 = vmatprep.subr.mxu0 0.0
    %76 = vmatpush2.xpose.msra.mxu0 0.0
    %77 = vmatprep.subr.mxu0 0.0
    %78 = vmatpush2.xpose.msra.mxu0 0.0
    %79 = vmatprep.subr.mxu0 0.0
    %80 = vmatpush2.xpose.msra.mxu0 0.0
    %81 = vmatprep.subr.mxu0 0.0
    %82 = vmatpush2.xpose.msra.mxu0 0.0
    %83 = vmatprep.subr.mxu0 0.0
    %84 = vmatpush2.xpose.msra.mxu0 0.0
    %85 = vmatprep.subr.mxu0 0.0
    %86 = vmatpush2.xpose.msra.mxu0 0.0
    %87 = vmatprep.subr.mxu0 0.0
    %88 = vmatpush2.xpose.msra.mxu0 0.0
    %89 = vmatprep.subr.mxu0 0.0
    %90 = vmatpush2.xpose.msra.mxu0 0.0
    %91 = vmatprep.subr.mxu0 0.0
    %92 = vmatpush2.xpose.msra.mxu0 0.0
    %93 = vmatprep.mubr.f32.mxu0 0.0
    %94 = vmatmul.mubr.f32.gmra.mxu0 %v12
    %v95 = vpop.f32.mrf.mxu0
    %v96 = vadd.f32 0.0, %v95
    %v97 = vpop.f32.mrf.mxu0
    %98 = vdwg.mxu0
    %99 = vst [vmem:[#allocation2] sm:$0xff] %v96
    // Predicated region
    $region10: #{linear_pallas.1} parent=1 // pred_check
      _
    $region11: #{linear_pallas.1} parent=1 // pred_check_branch
      %101 = sbr.rel (0) target = $region13
    $region12: #{linear_pallas.1} parent=1 // pred_region
      %s103 = ssub.s32 128, 128
      %104 = vsyncadd [#allocation3], %s103
      %s106 = sshll.u32 [#allocation2], 4
      %s107 = int_to_ptr.vmem [resolvable:$true] %s106
      %109 = dma.vmem_to_hbm [thread:$0]  %s107, 128, %s2, [#allocation3]
    $region13: #{linear_pallas.1} parent=1 // pred_fallthru
      _
    // Predicated region
    $region14: #{linear_pallas.1} parent=1 // pred_check
      _
    $region15: #{linear_pallas.1} parent=1 // pred_check_branch
      %111 = sbr.rel (0) target = $region17
    $region16: #{linear_pallas.1} parent=1 // pred_region
      %112 = dma.done [#allocation3], 128
    $region17: #{linear_pallas.1} parent=1 // pred_fallthru
      _
    %113 = vsyncpa [#allocation3], 1

</llo_original>
